<compile_context>
chip_gen: v5e
topology: v5e:2x2
jax: 0.10.0
libtpu: 0.0.40
codegen_flags: <defaults>
</compile_context>

<pallas_src>
import functools

import jax
import jax.numpy as jnp
import numpy as np
from jax.experimental import pallas as pl
from jax.experimental.pallas import tpu as pltpu

W1 = 0.1        # BYOT self-distill weight
W2 = 1e-6       # BYOT feature-distill weight
TEMP = 2.0      # KD temperature


# ----------------------------------------------------------------------------- #
# Fused CE + KD kernel
#   out = (1 - W1) * CE(teacher, targets) + W1 * sum_i KD(student_i, teacher)
# teacher:   (B, C)
# students:  ((H-1)*B, C)  -- heads stacked on the sublane axis
# targets:   (B, 1) int32
# ----------------------------------------------------------------------------- #
def _ce_kd_kernel(teacher_ref, students_ref, tgt_ref, o_ref, *, batch, n_students):
    x = teacher_ref[...].astype(jnp.float32)                 # (B, C)
    t = tgt_ref[...]                                         # (B, 1) int32

    # --- cross entropy on the final head (mean reduction) ---
    m = jnp.max(x, axis=1, keepdims=True)
    lse = jnp.log(jnp.sum(jnp.exp(x - m), axis=1, keepdims=True)) + m
    col = jax.lax.broadcasted_iota(jnp.int32, x.shape, 1)
    onehot = (col == t).astype(jnp.float32)
    tgt_logit = jnp.sum(x * onehot, axis=1, keepdims=True)   # (B, 1)
    ce = jnp.mean(lse - tgt_logit)

    # --- teacher softmax at temperature: computed ONCE, reused by every head ---
    bt = x * (1.0 / TEMP)
    mb = jnp.max(bt, axis=1, keepdims=True)
    eb = jnp.exp(bt - mb)
    pred = eb * pl.reciprocal(jnp.sum(eb, axis=1, keepdims=True), approx=True)

    # --- student heads: row-wise log_softmax over the stacked block ---
    s = students_ref[...].astype(jnp.float32) * (1.0 / TEMP)  # ((H-1)*B, C)
    ms = jnp.max(s, axis=1, keepdims=True)
    lse_s = jnp.log(jnp.sum(jnp.exp(s - ms), axis=1, keepdims=True)) + ms
    logp = s - lse_s

    kd_sum = jnp.float32(0.0)
    for h in range(n_students):                               # static unroll
        kd_sum = kd_sum + jnp.sum(logp[h * batch:(h + 1) * batch, :] * pred)
    kd_total = -kd_sum / batch        # == sum_i ( -mean_b sum_c logp_i * pred )

    o_ref[0, 0] = (1.0 - W1) * ce + W1 * kd_total


def ce_kd_loss(outputs, targets):
    teacher = outputs[0]
    B, C = teacher.shape
    n_students = len(outputs) - 1
    students = jnp.concatenate(list(outputs[1:]), axis=0)     # ((H-1)*B, C)
    t2d = targets.astype(jnp.int32).reshape(B, 1)
    kernel = functools.partial(_ce_kd_kernel, batch=B, n_students=n_students)
    out = pl.pallas_call(
        kernel,
        grid=(1,),
        in_specs=[
            pl.BlockSpec((B, C), lambda i: (0, 0)),
            pl.BlockSpec((n_students * B, C), lambda i: (0, 0)),
            pl.BlockSpec((B, 1), lambda i: (0, 0)),
        ],
        out_specs=pl.BlockSpec((1, 1), lambda i: (0, 0),
                               memory_space=pltpu.MemorySpace.SMEM),
        out_shape=jax.ShapeDtypeStruct((1, 1), jnp.float32),
    )(teacher, students, t2d)
    return out[0, 0]


# ----------------------------------------------------------------------------- #
# Cross-entropy only (used for the kd=False path)
# ----------------------------------------------------------------------------- #
def _ce_kernel(logits_ref, tgt_ref, o_ref):
    x = logits_ref[...].astype(jnp.float32)
    t = tgt_ref[...]
    m = jnp.max(x, axis=1, keepdims=True)
    lse = jnp.log(jnp.sum(jnp.exp(x - m), axis=1, keepdims=True)) + m
    col = jax.lax.broadcasted_iota(jnp.int32, x.shape, 1)
    onehot = (col == t).astype(jnp.float32)
    tgt_logit = jnp.sum(x * onehot, axis=1, keepdims=True)
    o_ref[0, 0] = jnp.mean(lse - tgt_logit)


def cross_entropy(logits, targets):
    B, C = logits.shape
    t2d = targets.astype(jnp.int32).reshape(B, 1)
    out = pl.pallas_call(
        _ce_kernel,
        grid=(1,),
        in_specs=[
            pl.BlockSpec((B, C), lambda i: (0, 0)),
            pl.BlockSpec((B, 1), lambda i: (0, 0)),
        ],
        out_specs=pl.BlockSpec((1, 1), lambda i: (0, 0),
                               memory_space=pltpu.MemorySpace.SMEM),
        out_shape=jax.ShapeDtypeStruct((1, 1), jnp.float32),
    )(logits, t2d)
    return out[0, 0]


# ----------------------------------------------------------------------------- #
# Fused feature-distillation kernel:
#   total = sum_i sum( (f_i - f_t)^2 * ((f_i>0)|(f_t>0)) )
# All student heads are streamed against the same teacher tile in one grid step.
# Grid = (row_partitions [parallel], row_tiles [arbitrary]).
# Output = per-partition lane partial sums (P, 1, 128), reduced in JAX.
# ----------------------------------------------------------------------------- #
def _fd_kernel(*args, n_students):
    s_refs = args[:n_students]            # each (tile, 128)
    t_ref = args[n_students]              # (tile, 128)
    o_ref = args[n_students + 1]          # (1, 1, 128)
    acc_ref = args[n_students + 2]        # (tile, 128) f32 VMEM scratch
    r = pl.program_id(1)

    @pl.when(r == 0)
    def _():
        acc_ref[...] = jnp.zeros_like(acc_ref)

    f2 = t_ref[...].astype(jnp.float32)   # teacher tile, loaded once per step
    for s_ref in s_refs:                  # static unroll over heads
        f1 = s_ref[...].astype(jnp.float32)
        d = f1 - f2
        acc_ref[...] += jnp.where(jnp.logical_or(f1 > 0, f2 > 0), d * d, 0.0)

    @pl.when(r == pl.num_programs(1) - 1)
    def _():
        # single cross-sublane reduce at the very end; lane reduce happens in JAX
        o_ref[...] = jnp.sum(acc_ref[...], axis=0)[None, None, :]


def fd_loss_sum(feats, max_tile_rows=1024):
    """Returns sum over i>=1 of FD(feats[i], feats[0])."""
    n_students = len(feats) - 1
    total = int(np.prod(feats[0].shape))
    assert total % 128 == 0, "feature element count must be a multiple of 128"
    R = total // 128

    # 2-way row partition (v7x: one partition per TensorCore; harmless elsewhere)
    n_parts = 2 if (R % 16 == 0) else 1
    R_part = R // n_parts

    if R_part % 8 == 0:
        tile = max(d for d in range(8, min(max_tile_rows, R_part) + 1, 8)
                   if R_part % d == 0)
    else:
        tile = R_part                      # full-extent fallback
    steps_per_part = R_part // tile

    teacher = feats[0].reshape(R, 128)
    students = [f.reshape(R, 128) for f in feats[1:]]

    row_spec = pl.BlockSpec((tile, 128),
                            lambda p, r: (p * steps_per_part + r, 0))
    kernel = functools.partial(_fd_kernel, n_students=n_students)

    out = pl.pallas_call(
        kernel,
        grid=(n_parts, steps_per_part),
        in_specs=[row_spec] * n_students + [row_spec],
        out_specs=pl.BlockSpec((1, 1, 128), lambda p, r: (p, 0, 0)),
        out_shape=jax.ShapeDtypeStruct((n_parts, 1, 128), jnp.float32),
        scratch_shapes=[pltpu.VMEM((tile, 128), jnp.float32)],
        compiler_params=pltpu.CompilerParams(
            dimension_semantics=("parallel", "arbitrary")),
    )(*students, teacher)
    return jnp.sum(out)


# ----------------------------------------------------------------------------- #
# BYOT forward (glue in plain JAX)
# ----------------------------------------------------------------------------- #
def byot_loss(outputs, feats, targets, kd=True, fd=True):
    if kd:
        if len(outputs) > 1:
            # outputs[0] is detached in PyTorch -> no forward-value difference
            loss = ce_kd_loss(outputs, targets)
        else:
            loss = (1.0 - W1) * cross_entropy(outputs[0], targets)
    else:
        loss = cross_entropy(outputs[0], targets)
    if fd and len(feats) > 1:
        loss = loss + W2 * fd_loss_sum(feats)
    return loss


# ----------------------------------------------------------------------------- #
# Pure-JAX reference (mirrors the PyTorch semantics) for verification
# ----------------------------------------------------------------------------- #
def _ref_ce(logits, targets):
    logp = jax.nn.log_softmax(logits, axis=1)
    return -jnp.mean(jnp.take_along_axis(logp, targets[:, None], axis=1))


def _ref_kd(s, t):
    pred = jax.nn.softmax(t / TEMP, axis=1)
    return -jnp.mean(jnp.sum(jax.nn.log_softmax(s / TEMP, axis=1) * pred, axis=1))


def _ref_fd(f1, f2):
    mask = jnp.logical_or(f1 > 0, f2 > 0).astype(jnp.float32)
    return jnp.sum(jnp.abs((f1 - f2) ** 2 * mask))


def _ref_byot(outputs, feats, targets):
    loss = (1.0 - W1) * _ref_ce(outputs[0], targets)
    for i in range(1, len(outputs)):
        loss += W1 * _ref_kd(outputs[i], outputs[0])
    for i in range(1, len(feats)):
        loss += W2 * _ref_fd(feats[i], feats[0])
    return loss


if __name__ == "__main__":
    key = jax.random.PRNGKey(0)
    B, C = 8, 32                    # batch, num classes
    FB, FC, FH, FW = 8, 4, 16, 16   # NCHW feature maps (8*4*16*16 = 8192 = 64*128)
    n_heads = 3                     # deep-supervision heads (outputs[0] is the final one)

    keys = jax.random.split(key, 2 * n_heads + 1)
    outputs = [jax.random.normal(keys[i], (B, C), dtype=jnp.float32)
               for i in range(n_heads)]
    feats = [jax.random.normal(keys[n_heads + i], (FB, FC, FH, FW), dtype=jnp.float32)
             for i in range(n_heads)]
    targets = jax.random.randint(keys[-1], (B,), 0, C, dtype=jnp.int32)

    loss_fn = jax.jit(byot_loss)
    loss = loss_fn(outputs, feats, targets)
    loss = jax.block_until_ready(loss)

    ref = _ref_byot(outputs, feats, targets)
    # tolerance accounts for pl.reciprocal(approx=True) in the teacher softmax
    np.testing.assert_allclose(np.asarray(loss), np.asarray(ref), rtol=1e-3, atol=1e-3)

    print("KERNEL_OK")
</pallas_src>

<mosaic_0001>
module attributes {stable_mosaic.version = 11 : i64} {
  func.func @_fd_kernel(%arg0: i32, %arg1: i32, %arg2: memref<32x128xf32, #tpu.memory_space<vmem>>, %arg3: memref<32x128xf32, #tpu.memory_space<vmem>>, %arg4: memref<32x128xf32, #tpu.memory_space<vmem>>, %arg5: memref<1x1x128xf32, #tpu.memory_space<vmem>>, %arg6: memref<32x128xf32, #tpu.memory_space<vmem>>) attributes {dimension_semantics = [#tpu.dimension_semantics<parallel>, #tpu.dimension_semantics<arbitrary>], iteration_bounds = array<i64: 2, 1>, scalar_prefetch = 0 : i64, scratch_operands = 1 : i64, tpu.core_type = #tpu.core_type<tc>, window_params = [{transform_indices = @transform_0, window_bounds = array<i64: 32, 128>}, {transform_indices = @transform_1, window_bounds = array<i64: 32, 128>}, {transform_indices = @transform_2, window_bounds = array<i64: 32, 128>}, {transform_indices = @transform_3, window_bounds = array<i64: 1, 1, 128>}]} {
    %c0_i32 = arith.constant 0 : i32
    %0 = arith.cmpi eq, %arg1, %c0_i32 : i32
    %1 = arith.extui %0 : i1 to i32
    %c0_i32_0 = arith.constant 0 : i32
    %2 = arith.cmpi ne, %1, %c0_i32_0 : i32
    scf.if %2 {
      %cst_21 = arith.constant 0.000000e+00 : f32
      %33 = vector.broadcast %cst_21 : f32 to vector<32x128xf32>
      %c0_22 = arith.constant 0 : index
      %c0_23 = arith.constant 0 : index
      %34 = vector.load %arg6[%c0_22, %c0_23] : memref<32x128xf32, #tpu.memory_space<vmem>>, vector<32x128xf32>
      tpu.vector_store %arg6[%c0_22, %c0_23], %33 {strides = array<i32>} : memref<32x128xf32, #tpu.memory_space<vmem>>, vector<32x128xf32>,
    } else {
    }
    %c0 = arith.constant 0 : index
    %c0_1 = arith.constant 0 : index
    %3 = vector.load %arg4[%c0, %c0_1] : memref<32x128xf32, #tpu.memory_space<vmem>>, vector<32x128xf32>
    %c0_2 = arith.constant 0 : index
    %c0_3 = arith.constant 0 : index
    %4 = vector.load %arg2[%c0_2, %c0_3] : memref<32x128xf32, #tpu.memory_space<vmem>>, vector<32x128xf32>
    %5 = arith.subf %4, %3 : vector<32x128xf32>
    %c0_4 = arith.constant 0 : index
    %c0_5 = arith.constant 0 : index
    %6 = vector.load %arg6[%c0_4, %c0_5] : memref<32x128xf32, #tpu.memory_space<vmem>>, vector<32x128xf32>
    %cst = arith.constant 0.000000e+00 : f32
    %7 = vector.broadcast %cst : f32 to vector<32x128xf32>
    %8 = arith.cmpf ogt, %4, %7 : vector<32x128xf32>
    %cst_6 = arith.constant 0.000000e+00 : f32
    %9 = vector.broadcast %cst_6 : f32 to vector<32x128xf32>
    %10 = arith.cmpf ogt, %3, %9 : vector<32x128xf32>
    %11 = arith.ori %8, %10 : vector<32x128xi1>
    %12 = arith.mulf %5, %5 : vector<32x128xf32>
    %cst_7 = arith.constant 0.000000e+00 : f32
    %13 = vector.broadcast %cst_7 : f32 to vector<32x128xf32>
    %14 = arith.select %11, %12, %13 : vector<32x128xi1>, vector<32x128xf32>
    %15 = arith.addf %6, %14 : vector<32x128xf32>
    %c0_8 = arith.constant 0 : index
    %c0_9 = arith.constant 0 : index
    %16 = vector.load %arg6[%c0_8, %c0_9] : memref<32x128xf32, #tpu.memory_space<vmem>>, vector<32x128xf32>
    tpu.vector_store %arg6[%c0_8, %c0_9], %15 {strides = array<i32>} : memref<32x128xf32, #tpu.memory_space<vmem>>, vector<32x128xf32>,
    %c0_10 = arith.constant 0 : index
    %c0_11 = arith.constant 0 : index
    %17 = vector.load %arg3[%c0_10, %c0_11] : memref<32x128xf32, #tpu.memory_space<vmem>>, vector<32x128xf32>
    %18 = arith.subf %17, %3 : vector<32x128xf32>
    %c0_12 = arith.constant 0 : index
    %c0_13 = arith.constant 0 : index
    %19 = vector.load %arg6[%c0_12, %c0_13] : memref<32x128xf32, #tpu.memory_space<vmem>>, vector<32x128xf32>
    %cst_14 = arith.constant 0.000000e+00 : f32
    %20 = vector.broadcast %cst_14 : f32 to vector<32x128xf32>
    %21 = arith.cmpf ogt, %17, %20 : vector<32x128xf32>
    %cst_15 = arith.constant 0.000000e+00 : f32
    %22 = vector.broadcast %cst_15 : f32 to vector<32x128xf32>
    %23 = arith.cmpf ogt, %3, %22 : vector<32x128xf32>
    %24 = arith.ori %21, %23 : vector<32x128xi1>
    %25 = arith.mulf %18, %18 : vector<32x128xf32>
    %cst_16 = arith.constant 0.000000e+00 : f32
    %26 = vector.broadcast %cst_16 : f32 to vector<32x128xf32>
    %27 = arith.select %24, %25, %26 : vector<32x128xi1>, vector<32x128xf32>
    %28 = arith.addf %19, %27 : vector<32x128xf32>
    %c0_17 = arith.constant 0 : index
    %c0_18 = arith.constant 0 : index
    %29 = vector.load %arg6[%c0_17, %c0_18] : memref<32x128xf32, #tpu.memory_space<vmem>>, vector<32x128xf32>
    tpu.vector_store %arg6[%c0_17, %c0_18], %28 {strides = array<i32>} : memref<32x128xf32, #tpu.memory_space<vmem>>, vector<32x128xf32>,
    %c0_i32_19 = arith.constant 0 : i32
    %30 = arith.cmpi eq, %arg1, %c0_i32_19 : i32
    %31 = arith.extui %30 : i1 to i32
    %c0_i32_20 = arith.constant 0 : i32
    %32 = arith.cmpi ne, %31, %c0_i32_20 : i32
    scf.if %32 {
      %c0_21 = arith.constant 0 : index
      %c0_22 = arith.constant 0 : index
      %33 = vector.load %arg6[%c0_21, %c0_22] : memref<32x128xf32, #tpu.memory_space<vmem>>, vector<32x128xf32>
      %cst_23 = arith.constant dense<0.000000e+00> : vector<128xf32>
      %34 = vector.multi_reduction <add>, %33, %cst_23 [0] : vector<32x128xf32> to vector<128xf32>
      %35 = vector.shape_cast %34 : vector<128xf32> to vector<1x1x128xf32>
      %c0_24 = arith.constant 0 : index
      %c0_25 = arith.constant 0 : index
      %c0_26 = arith.constant 0 : index
      %36 = vector.load %arg5[%c0_24, %c0_25, %c0_26] : memref<1x1x128xf32, #tpu.memory_space<vmem>>, vector<1x1x128xf32>
      tpu.vector_store %arg5[%c0_24, %c0_25, %c0_26], %35 {strides = array<i32>} : memref<1x1x128xf32, #tpu.memory_space<vmem>>, vector<1x1x128xf32>,
    } else {
    }
    return
  }
  func.func @transform_0(%arg0: i32, %arg1: i32) -> (i32, i32) {
    %c1_i32 = arith.constant 1 : i32
    %0 = arith.muli %arg0, %c1_i32 : i32
    %1 = arith.addi %0, %arg1 : i32
    %c0_i32 = arith.constant 0 : i32
    %c0_i32_0 = arith.constant 0 : i32
    return %1, %c0_i32 : i32, i32
  }
  func.func @transform_1(%arg0: i32, %arg1: i32) -> (i32, i32) {
    %c1_i32 = arith.constant 1 : i32
    %0 = arith.muli %arg0, %c1_i32 : i32
    %1 = arith.addi %0, %arg1 : i32
    %c0_i32 = arith.constant 0 : i32
    %c0_i32_0 = arith.constant 0 : i32
    return %1, %c0_i32 : i32, i32
  }
  func.func @transform_2(%arg0: i32, %arg1: i32) -> (i32, i32) {
    %c1_i32 = arith.constant 1 : i32
    %0 = arith.muli %arg0, %c1_i32 : i32
    %1 = arith.addi %0, %arg1 : i32
    %c0_i32 = arith.constant 0 : i32
    %c0_i32_0 = arith.constant 0 : i32
    return %1, %c0_i32 : i32, i32
  }
  func.func @transform_3(%arg0: i32, %arg1: i32) -> (i32, i32, i32) {
    %c0_i32 = arith.constant 0 : i32
    %c0_i32_0 = arith.constant 0 : i32
    %c0_i32_1 = arith.constant 0 : i32
    return %arg0, %c0_i32, %c0_i32_0 : i32, i32, i32
  }
}

module attributes {stable_mosaic.version = 11 : i64} {
  func.func @_ce_kd_kernel(%arg0: i32, %arg1: memref<8x32xf32, #tpu.memory_space<vmem>>, %arg2: memref<16x32xf32, #tpu.memory_space<vmem>>, %arg3: memref<8x1xi32, #tpu.memory_space<vmem>>, %arg4: memref<1x1xf32, #tpu.memory_space<smem>>) attributes {dimension_semantics = [#tpu.dimension_semantics<arbitrary>], iteration_bounds = array<i64: 1>, scalar_prefetch = 0 : i64, scratch_operands = 0 : i64, tpu.core_type = #tpu.core_type<tc>, window_params = [{pipeline_mode = #tpu.pipeline_mode<synchronous>, transform_indices = @transform_0, window_bounds = array<i64: 8, 32>}, {pipeline_mode = #tpu.pipeline_mode<synchronous>, transform_indices = @transform_1, window_bounds = array<i64: 16, 32>}, {pipeline_mode = #tpu.pipeline_mode<synchronous>, transform_indices = @transform_2, window_bounds = array<i64: 8, 1>}, {transform_indices = @transform_3, window_bounds = array<i64: 1, 1>}]} {
    %c0 = arith.constant 0 : index
    %c0_0 = arith.constant 0 : index
    %0 = vector.load %arg1[%c0, %c0_0] : memref<8x32xf32, #tpu.memory_space<vmem>>, vector<8x32xf32>
    %c0_1 = arith.constant 0 : index
    %c0_2 = arith.constant 0 : index
    %1 = vector.load %arg3[%c0_1, %c0_2] : memref<8x1xi32, #tpu.memory_space<vmem>>, vector<8x1xi32>
    %cst = arith.constant dense<0xFF800000> : vector<8xf32>
    %2 = vector.multi_reduction <maximumf>, %0, %cst [1] : vector<8x32xf32> to vector<8xf32>
    %3 = vector.shape_cast %2 : vector<8xf32> to vector<8x1xf32>
    %4 = vector.broadcast %3 : vector<8x1xf32> to vector<8x32xf32>
    %5 = arith.subf %0, %4 : vector<8x32xf32>
    %6 = math.exp %5 : vector<8x32xf32>
    %cst_3 = arith.constant dense<0.000000e+00> : vector<8xf32>
    %7 = vector.multi_reduction <add>, %6, %cst_3 [1] : vector<8x32xf32> to vector<8xf32>
    %8 = vector.shape_cast %7 : vector<8xf32> to vector<8x1xf32>
    %9 = math.log %8 : vector<8x1xf32>
    %10 = arith.addf %9, %3 : vector<8x1xf32>
    %11 = tpu.iota {dimensions = array<i32: 1>} : vector<8x32xi32>
    %12 = vector.broadcast %1 : vector<8x1xi32> to vector<8x32xi32>
    %13 = arith.cmpi eq, %11, %12 : vector<8x32xi32>
    %14 = arith.extui %13 : vector<8x32xi1> to vector<8x32xi32>
    %15 = arith.sitofp %14 : vector<8x32xi32> to vector<8x32xf32>
    %16 = arith.mulf %0, %15 : vector<8x32xf32>
    %cst_4 = arith.constant dense<0.000000e+00> : vector<8xf32>
    %17 = vector.multi_reduction <add>, %16, %cst_4 [1] : vector<8x32xf32> to vector<8xf32>
    %18 = vector.shape_cast %17 : vector<8xf32> to vector<8x1xf32>
    %19 = arith.subf %10, %18 : vector<8x1xf32>
    %20 = vector.shape_cast %19 : vector<8x1xf32> to vector<1x8x1xf32>
    %cst_5 = arith.constant dense<0.000000e+00> : vector<1xf32>
    %21 = vector.multi_reduction <add>, %20, %cst_5 [1, 2] : vector<1x8x1xf32> to vector<1xf32>
    %22 = vector.shape_cast %21 : vector<1xf32> to vector<1x1x1xf32>
    %23 = vector.extract %22[0, 0, 0] : f32 from vector<1x1x1xf32>
    %cst_6 = arith.constant 8.000000e+00 : f32
    %24 = arith.divf %23, %cst_6 : f32
    %cst_7 = arith.constant 5.000000e-01 : f32
    %25 = vector.broadcast %cst_7 : f32 to vector<8x32xf32>
    %26 = arith.mulf %0, %25 : vector<8x32xf32>
    %cst_8 = arith.constant dense<0xFF800000> : vector<8xf32>
    %27 = vector.multi_reduction <maximumf>, %26, %cst_8 [1] : vector<8x32xf32> to vector<8xf32>
    %28 = vector.shape_cast %27 : vector<8xf32> to vector<8x1xf32>
    %29 = vector.broadcast %28 : vector<8x1xf32> to vector<8x32xf32>
    %30 = arith.subf %26, %29 : vector<8x32xf32>
    %31 = math.exp %30 : vector<8x32xf32>
    %cst_9 = arith.constant dense<0.000000e+00> : vector<8xf32>
    %32 = vector.multi_reduction <add>, %31, %cst_9 [1] : vector<8x32xf32> to vector<8xf32>
    %33 = vector.shape_cast %32 : vector<8xf32> to vector<8x1xf32>
    %34 = tpu.reciprocal %33 {approx = true} : vector<8x1xf32> -> vector<8x1xf32>
    %35 = vector.broadcast %34 : vector<8x1xf32> to vector<8x32xf32>
    %36 = arith.mulf %31, %35 : vector<8x32xf32>
    %c0_10 = arith.constant 0 : index
    %c0_11 = arith.constant 0 : index
    %37 = vector.load %arg2[%c0_10, %c0_11] : memref<16x32xf32, #tpu.memory_space<vmem>>, vector<16x32xf32>
    %cst_12 = arith.constant 5.000000e-01 : f32
    %38 = vector.broadcast %cst_12 : f32 to vector<16x32xf32>
    %39 = arith.mulf %37, %38 : vector<16x32xf32>
    %cst_13 = arith.constant dense<0xFF800000> : vector<16xf32>
    %40 = vector.multi_reduction <maximumf>, %39, %cst_13 [1] : vector<16x32xf32> to vector<16xf32>
    %41 = vector.shape_cast %40 : vector<16xf32> to vector<16x1xf32>
    %42 = vector.broadcast %41 : vector<16x1xf32> to vector<16x32xf32>
    %43 = arith.subf %39, %42 : vector<16x32xf32>
    %44 = math.exp %43 : vector<16x32xf32>
    %cst_14 = arith.constant dense<0.000000e+00> : vector<16xf32>
    %45 = vector.multi_reduction <add>, %44, %cst_14 [1] : vector<16x32xf32> to vector<16xf32>
    %46 = vector.shape_cast %45 : vector<16xf32> to vector<16x1xf32>
    %47 = math.log %46 : vector<16x1xf32>
    %48 = arith.addf %47, %41 : vector<16x1xf32>
    %49 = vector.broadcast %48 : vector<16x1xf32> to vector<16x32xf32>
    %50 = arith.subf %39, %49 : vector<16x32xf32>
    %51 = vector.extract_strided_slice %50 {offsets = [0, 0], sizes = [8, 32], strides = [1, 1]} : vector<16x32xf32> to vector<8x32xf32>
    %52 = arith.mulf %51, %36 : vector<8x32xf32>
    %53 = vector.shape_cast %52 : vector<8x32xf32> to vector<1x8x32xf32>
    %cst_15 = arith.constant dense<0.000000e+00> : vector<1xf32>
    %54 = vector.multi_reduction <add>, %53, %cst_15 [1, 2] : vector<1x8x32xf32> to vector<1xf32>
    %55 = vector.shape_cast %54 : vector<1xf32> to vector<1x1x1xf32>
    %56 = vector.extract %55[0, 0, 0] : f32 from vector<1x1x1xf32>
    %cst_16 = arith.constant 0.000000e+00 : f32
    %57 = arith.addf %cst_16, %56 : f32
    %58 = vector.extract_strided_slice %50 {offsets = [8, 0], sizes = [8, 32], strides = [1, 1]} : vector<16x32xf32> to vector<8x32xf32>
    %59 = arith.mulf %58, %36 : vector<8x32xf32>
    %60 = vector.shape_cast %59 : vector<8x32xf32> to vector<1x8x32xf32>
    %cst_17 = arith.constant dense<0.000000e+00> : vector<1xf32>
    %61 = vector.multi_reduction <add>, %60, %cst_17 [1, 2] : vector<1x8x32xf32> to vector<1xf32>
    %62 = vector.shape_cast %61 : vector<1xf32> to vector<1x1x1xf32>
    %63 = vector.extract %62[0, 0, 0] : f32 from vector<1x1x1xf32>
    %64 = arith.addf %57, %63 : f32
    %cst_18 = arith.constant 0.000000e+00 : f32
    %65 = arith.subf %cst_18, %64 : f32
    %cst_19 = arith.constant 8.000000e+00 : f32
    %66 = arith.divf %65, %cst_19 : f32
    %cst_20 = arith.constant 0.899999976 : f32
    %67 = arith.mulf %cst_20, %24 : f32
    %cst_21 = arith.constant 1.000000e-01 : f32
    %68 = arith.mulf %cst_21, %66 : f32
    %69 = arith.addf %67, %68 : f32
    %c0_22 = arith.constant 0 : index
    %c0_23 = arith.constant 0 : index
    %70 = memref.load %arg4[%c0_22, %c0_23] : memref<1x1xf32, #tpu.memory_space<smem>>
    memref.store %69, %arg4[%c0_22, %c0_23] : memref<1x1xf32, #tpu.memory_space<smem>>
    return
  }
  func.func @transform_0(%arg0: i32) -> (i32, i32) {
    %c0_i32 = arith.constant 0 : i32
    %c0_i32_0 = arith.constant 0 : i32
    %c0_i32_1 = arith.constant 0 : i32
    return %c0_i32, %c0_i32_0 : i32, i32
  }
  func.func @transform_1(%arg0: i32) -> (i32, i32) {
    %c0_i32 = arith.constant 0 : i32
    %c0_i32_0 = arith.constant 0 : i32
    %c0_i32_1 = arith.constant 0 : i32
    return %c0_i32, %c0_i32_0 : i32, i32
  }
  func.func @transform_2(%arg0: i32) -> (i32, i32) {
    %c0_i32 = arith.constant 0 : i32
    %c0_i32_0 = arith.constant 0 : i32
    %c0_i32_1 = arith.constant 0 : i32
    return %c0_i32, %c0_i32_0 : i32, i32
  }
  func.func @transform_3(%arg0: i32) -> (i32, i32) {
    %c0_i32 = arith.constant 0 : i32
    %c0_i32_0 = arith.constant 0 : i32
    %c0_i32_1 = arith.constant 0 : i32
    return %c0_i32, %c0_i32_0 : i32, i32
  }
}

</mosaic_0001>

<llo_original>
// kernel: byot_loss.2
$region0: #{byot_loss.2}
  #allocation0 [shape = 'u32[]', space=smem, size = 0x4, offset = 0x4, fixed_abs, tag = 'smem constant byte address 0x4 - core index']
  #allocation1 [shape = 'u32[72,128]{1,0:T(1,128)}', space=vmem, size = 0x9000, scoped, tag = 'internal scratch']
  %s0 = inlined_call_operand.vmem [shape: f32[8,32], index: 0, kind: input, shape index: {}]
  %s1 = inlined_call_operand.vmem [shape: f32[16,32], index: 1, kind: input, shape index: {}]
  %s2 = inlined_call_operand.vmem [shape: s32[8,1], index: 2, kind: input, shape index: {}]
  %s3 = inlined_call_operand.hbm [shape: f32[1,1], index: 3, kind: output, shape index: {}]
  %s4 = sld [smem:[#allocation0]]
  $region22: #{byot_loss.2} parent=0
    _
  %s6 = ssub.s32 1, %s4
  %s7 = scalar_select 0, %s6, %s4
  $region1: #{byot_loss.2} parent=0
    #allocation2 [shape = 'u8[512]{0}', space=smem, size = 0x200, scoped, tag = 'output window, operand 0, single buffered']
    #allocation3 [shape = 's32[1]{0}', space=sflag, size = 0x4, scoped, tag = 'scoped memory for byot_loss.2']
    %8 = vsyncpa [#allocation3], 0
    // Predicated region
    $region2: #{byot_loss.2} parent=1 // pred_check
      _
    $region3: #{byot_loss.2} parent=1 // pred_check_branch
      %10 = sbr.rel (0) target = $region5
    $region4: #{byot_loss.2} parent=1 // pred_region
      _
    $region5: #{byot_loss.2} parent=1 // pred_fallthru
      _
    // Predicated region
    $region6: #{byot_loss.2} parent=1 // pred_check
      _
    $region7: #{byot_loss.2} parent=1 // pred_check_branch
      %12 = sbr.rel (0) target = $region9
    $region8: #{byot_loss.2} parent=1 // pred_region
      _
    $region9: #{byot_loss.2} parent=1 // pred_fallthru
      _
    // Predicated region
    $region10: #{byot_loss.2} parent=1 // pred_check
      _
    $region11: #{byot_loss.2} parent=1 // pred_check_branch
      %14 = sbr.rel (0) target = $region13
    $region12: #{byot_loss.2} parent=1 // pred_region
      _
    $region13: #{byot_loss.2} parent=1 // pred_fallthru
      _
    %v15 = vld [vmem:[%s0] sm:$0xff]
    %v16 = vld [vmem:[%s2] sm:$0xff]
    %vm17 = vcmask 261120
    %v18 = vsel %vm17, %v15, -inf
    %19 = vmax.xlane.f32.xlu0 %v18
    %v20 = vpop.xlane.xlu0 %19
    %v21 = vsub.f32 %v15, %v20
    %v22 = vmul.f32 %v21, 1.442695
    %v23 = vpow.pop %v22
    %v24 = vsel %vm17, %v23, 0.0
    %25 = vadd.xlane.f32.xlu0 %v24
    %v26 = vpop.xlane.xlu0 %25
    %v27 = vlog2.pop %v26
    %v28 = vmul.f32 %v27, 0.6931472
    %v29 = vadd.f32 %v28, %v20
    %v30 = vlaneseq
    %v31 = vand.u32 %v30, 127
    %32 = vset.pattern.permute.xlu0 0
    %33 = vperm.xlu0 %32, %v16
    %v34 = vpop.permute.xlu0 %33
    %vm35 = vcmp.eq.s32.totalorder %v31, %v34
    %v36 = vsel %vm35, 1, 0
    %v37 = vcvt.s32.f32 %v36
    %v38 = vmul.f32 %v15, %v37
    %v39 = vsel %vm17, %v38, 0.0
    %40 = vadd.xlane.f32.xlu0 %v39
    %v41 = vpop.xlane.xlu0 %40
    %v42 = vsub.f32 %v29, %v41
    %vm43 = vcmask 7168
    %v44 = vsel %vm43, %v42, 0.0
    %45 = vadd.xlane.f32.xlu0 %v44
    %v46 = vpop.xlane.xlu0 %45
    %v47 = vrot.slane %v46, 4
    %v48 = vadd.f32 %v46, %v47
    %v49 = vrot.slane %v48, 2
    %v50 = vadd.f32 %v48, %v49
    %v51 = vrot.slane %v50, 1
    %v52 = vadd.f32 %v50, %v51
    %s53 = vtos %v52
    %v54 = vrcp.pop 8.0
    %v55 = vmul.f32 8.0, %v54
    %v56 = vsub.f32 1.0, %v55
    %v57 = vmul.f32 %v54, %v56
    %v58 = vadd.f32 %v54, %v57
    %vm59 = vweird.f32 %v54
    %v60 = vsel %vm59, %v54, %v58
    %s61 = vtos %v60
    %s62 = smul.f32 %s53, %s61
    %v63 = vmul.f32 %v15, 0.5
    %v64 = vsel %vm17, %v63, -inf
    %65 = vmax.xlane.f32.xlu0 %v64
    %v66 = vpop.xlane.xlu0 %65
    %v67 = vsub.f32 %v63, %v66
    %v68 = vmul.f32 %v67, 1.442695
    %v69 = vpow.pop %v68
    %v70 = vsel %vm17, %v69, 0.0
    %71 = vadd.xlane.f32.xlu0 %v70
    %v72 = vpop.xlane.xlu0 %71
    %v73 = vrcp.pop %v72
    %v74 = vmul.f32 %v69, %v73
    %v75 = vld [vmem:[%s1] sm:$0xff]
    %v76 = vld [vmem:[%s1 + $0x8] sm:$0xff]
    %v77 = vmul.f32 %v75, 0.5
    %v78 = vmul.f32 %v76, 0.5
    %v79 = vsel %vm17, %v77, -inf
    %80 = vmax.xlane.f32.xlu0 %v79
    %v81 = vpop.xlane.xlu0 %80
    %v82 = vsel %vm17, %v78, -inf
    %83 = vmax.xlane.f32.xlu0 %v82
    %v84 = vpop.xlane.xlu0 %83
    %v85 = vsub.f32 %v77, %v81
    %v86 = vsub.f32 %v78, %v84
    %v87 = vmul.f32 %v85, 1.442695
    %v88 = vpow.pop %v87
    %v89 = vmul.f32 %v86, 1.442695
    %v90 = vpow.pop %v89
    %v91 = vsel %vm17, %v88, 0.0
    %92 = vadd.xlane.f32.xlu0 %v91
    %v93 = vpop.xlane.xlu0 %92
    %v94 = vsel %vm17, %v90, 0.0
    %95 = vadd.xlane.f32.xlu0 %v94
    %v96 = vpop.xlane.xlu0 %95
    %v97 = vlog2.pop %v93
    %v98 = vmul.f32 %v97, 0.6931472
    %v99 = vlog2.pop %v96
    %v100 = vmul.f32 %v99, 0.6931472
    %v101 = vadd.f32 %v98, %v81
    %v102 = vadd.f32 %v100, %v84
    %v103 = vsub.f32 %v77, %v101
    %v104 = vsub.f32 %v78, %v102
    %v105 = vmul.f32 %v103, %v74
    %v106 = vsel %vm17, %v105, 0.0
    %107 = vadd.xlane.f32.xlu0 %v106
    %v108 = vpop.xlane.xlu0 %107
    %v109 = vrot.slane %v108, 4
    %v110 = vadd.f32 %v108, %v109
    %v111 = vrot.slane %v110, 2
    %v112 = vadd.f32 %v110, %v111
    %v113 = vrot.slane %v112, 1
    %v114 = vadd.f32 %v112, %v113
    %s115 = vtos %v114
    %s116 = sadd.f32 %s115, 0.0
    %v117 = vmul.f32 %v104, %v74
    %v118 = vsel %vm17, %v117, 0.0
    %119 = vadd.xlane.f32.xlu0 %v118
    %v120 = vpop.xlane.xlu0 %119
    %v121 = vrot.slane %v120, 4
    %v122 = vadd.f32 %v120, %v121
    %v123 = vrot.slane %v122, 2
    %v124 = vadd.f32 %v122, %v123
    %v125 = vrot.slane %v124, 1
    %v126 = vadd.f32 %v124, %v125
    %s127 = vtos %v126
    %s128 = sadd.f32 %s116, %s127
    %s129 = ssub.f32 0.0, %s128
    %v130 = vrcp.pop 8.0
    %v131 = vmul.f32 8.0, %v130
    %v132 = vsub.f32 1.0, %v131
    %v133 = vmul.f32 %v130, %v132
    %v134 = vadd.f32 %v130, %v133
    %vm135 = vweird.f32 %v130
    %v136 = vsel %vm135, %v130, %v134
    %s137 = vtos %v136
    %s138 = smul.f32 %s129, %s137
    %s139 = smul.f32 %s62, 0.9
    %s140 = smul.f32 %s138, 0.1
    %s141 = sadd.f32 %s139, %s140
    %s142 = scalar_lea.smem [#allocation2], 0
    %143 = sst [smem:[%s142]] %s141
    // Predicated region
    $region14: #{byot_loss.2} parent=1 // pred_check
      _
    $region15: #{byot_loss.2} parent=1 // pred_check_branch
      %145 = sbr.rel (0) target = $region17
    $region16: #{byot_loss.2} parent=1 // pred_region
      %147 = vsyncadd [#allocation3], 0
      %s149 = sshll.u32 %s3, 4
      %s150 = int_to_ptr.hbm [resolvable:$true] %s149
      %152 = dma.smem_to_hbm [#allocation2], 16, %s150, [#allocation3]
    $region17: #{byot_loss.2} parent=1 // pred_fallthru
      _
    // Predicated region
    $region18: #{byot_loss.2} parent=1 // pred_check
      _
    $region19: #{byot_loss.2} parent=1 // pred_check_branch
      %154 = sbr.rel (0) target = $region21
    $region20: #{byot_loss.2} parent=1 // pred_region
      %156 = dma.done [#allocation3], 16
    $region21: #{byot_loss.2} parent=1 // pred_fallthru
      _
    %157 = sfence
    %158 = vsyncpa [#allocation3], 1

// kernel: byot_loss.3
$region0: #{byot_loss.3}
  #allocation0 [shape = 'u32[]', space=smem, size = 0x4, offset = 0x4, fixed_abs, tag = 'smem constant byte address 0x4 - core index']
  #allocation1 [shape = 'u32[72,128]{1,0:T(1,128)}', space=vmem, size = 0x9000, scoped, tag = 'internal scratch']
  #allocation2 [shape = 'f32[32,128]{1,0:T(8,128)}', space=vmem, size = 0x4000, scoped, tag = 'scratch operand']
  %s0 = inlined_call_operand.vmem [shape: f32[64,128], index: 0, kind: input, shape index: {}]
  %s1 = inlined_call_operand.vmem [shape: f32[64,128], index: 1, kind: input, shape index: {}]
  %s2 = inlined_call_operand.vmem [shape: f32[64,128], index: 2, kind: input, shape index: {}]
  %s3 = inlined_call_operand.vmem [shape: f32[2,1,128], index: 3, kind: output, shape index: {}]
  %s4 = sld [smem:[#allocation0]]
  $region53: #{byot_loss.3} parent=0
    _
  %s6 = ssub.s32 1, %s4
  %s7 = scalar_select 0, %s6, %s4
  loop: start=0, step=1, limit=4
  $region2: #{byot_loss.3} parent=0 // loop_pre_header
    _
  $region3: #{byot_loss.3} parent=0 // loop_header
    %s9 = sphi 0, %s13
    %p10 = scmp.ge.s32.totalorder %s9, 4
    %s16 = sphi 0, %s28
    %s17 = sphi 0, %s24
    %s18 = sphi 0, %s16
    %s19 = sphi 0, %s17
    %s20 = sphi 0, %s18
    %s21 = sphi 0, %s19
    %s33 = sphi 0, %s35
    %s36 = sphi 0, %s33
    %s37 = sphi 0, %s36
    %s53 = sphi 0, %s37
    %s61 = sphi 0, %s63
    %s64 = sphi 0, %s61
    %s65 = sphi 0, %s64
    %s81 = sphi 0, %s65
    %s89 = sphi 0, %s91
    %s92 = sphi 0, %s89
    %s93 = sphi 0, %s92
    %s109 = sphi 0, %s93
    %s115 = sphi 0, %s117
    %s118 = sphi 0, %s115
    %s119 = sphi 0, %s118
    %s135 = sphi 0, %s119
  $region4: #{byot_loss.3} parent=0 // loop_header_branch
    %12 = sbr.rel (%p10) target = $region8
  $region5: #{byot_loss.3} parent=0 // loop_body
    %s14 = ssub.s32 %s9, 1
    %s15 = ssub.s32 %s9, 2
    %s22 = sadd.s32 1, %s17
    %p23 = scmp.ge.s32.totalorder %s22, 1
    %s24 = scalar_select %p23, 0, %s22
    %s25 = sadd.s32 1, %s16
    %s26 = scalar_select %p23, %s25, %s16
    %p27 = scmp.ge.s32.totalorder %s26, 2
    %s28 = scalar_select %p27, 0, %s26
    %s29 = sadd.s32 %s16, %s17
    %s30 = sadd.s32 %s28, %s24
    %s31 = ssub.s32 %s29, %s30
    %p32 = scmp.eq.s32.totalorder %s31, 0
    %s34 = sadd.s32 %s33, 1
    %s35 = scalar_select %p32, %s33, %s34
    %p38 = pneg %p32
    %p39 = scmp.eq.s32.totalorder %s9, 1
    %p40 = por %p38, %p39
    %p41 = scmp.ne.s32.totalorder %s33, %s36
    %p42 = scmp.eq.s32.totalorder %s9, 0
    %p43 = por %p41, %p42
    %p44 = scmp.ne.s32.totalorder %s33, %s36
    %p45 = scmp.eq.s32.totalorder %s14, 1
    %p46 = por %p44, %p45
    %p47 = scmp.ne.s32.totalorder %s36, %s37
    %p48 = scmp.eq.s32.totalorder %s14, 0
    %p49 = por %p47, %p48
    %p50 = scmp.ne.s32.totalorder %s36, %s37
    %p51 = scmp.eq.s32.totalorder %s15, 1
    %p52 = por %p50, %p51
    %p54 = scmp.ne.s32.totalorder %s37, %s53
    %p55 = scmp.eq.s32.totalorder %s15, 0
    %p56 = por %p54, %p55
    %s57 = sadd.s32 %s16, %s17
    %s58 = sadd.s32 %s28, %s24
    %s59 = ssub.s32 %s57, %s58
    %p60 = scmp.eq.s32.totalorder %s59, 0
    %s62 = sadd.s32 %s61, 1
    %s63 = scalar_select %p60, %s61, %s62
    %p66 = pneg %p60
    %p67 = scmp.eq.s32.totalorder %s9, 1
    %p68 = por %p66, %p67
    %p69 = scmp.ne.s32.totalorder %s61, %s64
    %p70 = scmp.eq.s32.totalorder %s9, 0
    %p71 = por %p69, %p70
    %p72 = scmp.ne.s32.totalorder %s61, %s64
    %p73 = scmp.eq.s32.totalorder %s14, 1
    %p74 = por %p72, %p73
    %p75 = scmp.ne.s32.totalorder %s64, %s65
    %p76 = scmp.eq.s32.totalorder %s14, 0
    %p77 = por %p75, %p76
    %p78 = scmp.ne.s32.totalorder %s64, %s65
    %p79 = scmp.eq.s32.totalorder %s15, 1
    %p80 = por %p78, %p79
    %p82 = scmp.ne.s32.totalorder %s65, %s81
    %p83 = scmp.eq.s32.totalorder %s15, 0
    %p84 = por %p82, %p83
    %s85 = sadd.s32 %s16, %s17
    %s86 = sadd.s32 %s28, %s24
    %s87 = ssub.s32 %s85, %s86
    %p88 = scmp.eq.s32.totalorder %s87, 0
    %s90 = sadd.s32 %s89, 1
    %s91 = scalar_select %p88, %s89, %s90
    %p94 = pneg %p88
    %p95 = scmp.eq.s32.totalorder %s9, 1
    %p96 = por %p94, %p95
    %p97 = scmp.ne.s32.totalorder %s89, %s92
    %p98 = scmp.eq.s32.totalorder %s9, 0
    %p99 = por %p97, %p98
    %p100 = scmp.ne.s32.totalorder %s89, %s92
    %p101 = scmp.eq.s32.totalorder %s14, 1
    %p102 = por %p100, %p101
    %p103 = scmp.ne.s32.totalorder %s92, %s93
    %p104 = scmp.eq.s32.totalorder %s14, 0
    %p105 = por %p103, %p104
    %p106 = scmp.ne.s32.totalorder %s92, %s93
    %p107 = scmp.eq.s32.totalorder %s15, 1
    %p108 = por %p106, %p107
    %p110 = scmp.ne.s32.totalorder %s93, %s109
    %p111 = scmp.eq.s32.totalorder %s15, 0
    %p112 = por %p110, %p111
    %s113 = ssub.s32 %s16, %s28
    %p114 = scmp.eq.s32.totalorder %s113, 0
    %s116 = sadd.s32 %s115, 1
    %s117 = scalar_select %p114, %s115, %s116
    %p120 = pneg %p114
    %p121 = scmp.eq.s32.totalorder %s9, 1
    %p122 = por %p120, %p121
    %p123 = scmp.ne.s32.totalorder %s115, %s118
    %p124 = scmp.eq.s32.totalorder %s9, 0
    %p125 = por %p123, %p124
    %p126 = scmp.ne.s32.totalorder %s115, %s118
    %p127 = scmp.eq.s32.totalorder %s14, 1
    %p128 = por %p126, %p127
    %p129 = scmp.ne.s32.totalorder %s118, %s119
    %p130 = scmp.eq.s32.totalorder %s14, 0
    %p131 = por %p129, %p130
    %p132 = scmp.ne.s32.totalorder %s118, %s119
    %p133 = scmp.eq.s32.totalorder %s15, 1
    %p134 = por %p132, %p133
    %p136 = scmp.ne.s32.totalorder %s119, %s135
    %p137 = scmp.eq.s32.totalorder %s15, 0
    %p138 = por %p136, %p137
    %p139 = scmp.le.s32.totalorder 1, %s9
    %p140 = scmp.lt.s32.totalorder %s9, 3
    %p141 = pnand %p139, %p140
    %p142 = pneg %p141
    // Predicated region
    $region9: #{byot_loss.3} parent=5 // pred_check
      _
    $region10: #{byot_loss.3} parent=5 // pred_check_branch
      %144 = sbr.rel (%p141) target = $region12
    $region11: #{byot_loss.3} parent=5 // pred_region
      %s145 = ssub.s32 %s9, 1
    $region12: #{byot_loss.3} parent=5 // pred_fallthru
      _
    %p146 = scmp.lt.s32.totalorder %s9, 2
    // Predicated region
    $region13: #{byot_loss.3} parent=5 // pred_check
      %p147 = pneg %p146
    $region14: #{byot_loss.3} parent=5 // pred_check_branch
      %149 = sbr.rel (%p147) target = $region16
    $region15: #{byot_loss.3} parent=5 // pred_region
      // Predicated region
      $region17: #{byot_loss.3} parent=15 // pred_check
        %p150 = pneg %p43
      $region18: #{byot_loss.3} parent=15 // pred_check_branch
        %152 = sbr.rel (%p150) target = $region20
      $region19: #{byot_loss.3} parent=15 // pred_region
        %s153 = sadd.s32 %s16, %s17
        %s154 = smul.u32 4, %s153
        %p155 = scmp.lt.s32.totalorder %s154, 7
        %s156 = scalar_select %p155, %s154, 7
        %s157 = smul.addr %s156, 8
        %s158 = scalar_lea.vmem %s0, %s157
        %s159 = sadd.s32 %s16, %s17
        %s160 = smul.u32 4, %s159
      $region20: #{byot_loss.3} parent=15 // pred_fallthru
        _
      // Predicated region
      $region21: #{byot_loss.3} parent=15 // pred_check
        %p161 = pneg %p71
      $region22: #{byot_loss.3} parent=15 // pred_check_branch
        %163 = sbr.rel (%p161) target = $region24
      $region23: #{byot_loss.3} parent=15 // pred_region
        %s164 = sadd.s32 %s16, %s17
        %s165 = smul.u32 4, %s164
        %p166 = scmp.lt.s32.totalorder %s165, 7
        %s167 = scalar_select %p166, %s165, 7
        %s168 = smul.addr %s167, 8
        %s169 = scalar_lea.vmem %s1, %s168
        %s170 = sadd.s32 %s16, %s17
        %s171 = smul.u32 4, %s170
      $region24: #{byot_loss.3} parent=15 // pred_fallthru
        _
      // Predicated region
      $region25: #{byot_loss.3} parent=15 // pred_check
        %p172 = pneg %p99
      $region26: #{byot_loss.3} parent=15 // pred_check_branch
        %174 = sbr.rel (%p172) target = $region28
      $region27: #{byot_loss.3} parent=15 // pred_region
        %s175 = sadd.s32 %s16, %s17
        %s176 = smul.u32 4, %s175
        %p177 = scmp.lt.s32.totalorder %s176, 7
        %s178 = scalar_select %p177, %s176, 7
        %s179 = smul.addr %s178, 8
        %s180 = scalar_lea.vmem %s2, %s179
        %s181 = sadd.s32 %s16, %s17
        %s182 = smul.u32 4, %s181
      $region28: #{byot_loss.3} parent=15 // pred_fallthru
        _
    $region16: #{byot_loss.3} parent=5 // pred_fallthru
      _
    %p183 = scmp.le.s32.totalorder 1, %s9
    %p184 = scmp.lt.s32.totalorder %s9, 3
    %p185 = pnand %p183, %p184
    %p186 = pneg %p185
    // Predicated region
    $region29: #{byot_loss.3} parent=5 // pred_check
      _
    $region30: #{byot_loss.3} parent=5 // pred_check_branch
      %188 = sbr.rel (%p185) target = $region32
    $region31: #{byot_loss.3} parent=5 // pred_region
      %s189 = ssub.s32 %s9, 1
      %s190 = sadd.s32 %s18, %s19
      %s191 = smul.u32 4, %s190
      %p192 = scmp.lt.s32.totalorder %s191, 7
      %s193 = scalar_select %p192, %s191, 7
      %s194 = smul.addr %s193, 8
      %s195 = scalar_lea.vmem %s0, %s194
      %p196 = pneg %p49
      %p197 = pneg %p46
      %s198 = sadd.s32 %s18, %s19
      %s199 = smul.u32 4, %s198
      %p200 = scmp.lt.s32.totalorder %s199, 7
      %s201 = scalar_select %p200, %s199, 7
      %s202 = smul.addr %s201, 8
      %s203 = scalar_lea.vmem %s1, %s202
      %p204 = pneg %p77
      %p205 = pneg %p74
      %s206 = sadd.s32 %s18, %s19
      %s207 = smul.u32 4, %s206
      %p208 = scmp.lt.s32.totalorder %s207, 7
      %s209 = scalar_select %p208, %s207, 7
      %s210 = smul.addr %s209, 8
      %s211 = scalar_lea.vmem %s2, %s210
      %p212 = pneg %p105
      %p213 = pneg %p102
      %p214 = pneg %p131
      %p215 = pneg %p128
      %p216 = scmp.lt.s32.totalorder %s18, 1
      %s217 = scalar_select %p216, %s18, 1
      %s218 = scalar_lea.vmem %s3, %s217
      %s219 = sadd.s32 %s18, %s19
      %s220 = smul.u32 4, %s219
      %p221 = scmp.lt.s32.totalorder %s220, 7
      %s222 = scalar_select %p221, %s220, 7
      %s223 = smul.addr %s222, 8
      %s224 = scalar_lea.vmem %s0, %s223
      %s225 = sadd.s32 %s18, %s19
      %s226 = smul.u32 4, %s225
      %s227 = sadd.s32 %s18, %s19
      %s228 = smul.u32 4, %s227
      %p229 = scmp.lt.s32.totalorder %s228, 7
      %s230 = scalar_select %p229, %s228, 7
      %s231 = smul.addr %s230, 8
      %s232 = scalar_lea.vmem %s1, %s231
      %s233 = sadd.s32 %s18, %s19
      %s234 = smul.u32 4, %s233
      %s235 = sadd.s32 %s18, %s19
      %s236 = smul.u32 4, %s235
      %p237 = scmp.lt.s32.totalorder %s236, 7
      %s238 = scalar_select %p237, %s236, 7
      %s239 = smul.addr %s238, 8
      %s240 = scalar_lea.vmem %s2, %s239
      %s241 = sadd.s32 %s18, %s19
      %s242 = smul.u32 4, %s241
      %p243 = scmp.lt.s32.totalorder %s18, 1
      %s244 = scalar_select %p243, %s18, 1
      %s245 = scalar_lea.vmem %s3, %s244
      %p246 = scmp.eq.s32.totalorder %s19, 0
      // Predicated region
      $region33: #{byot_loss.3} parent=31 // pred_check
        %p247 = pneg %p246
      $region34: #{byot_loss.3} parent=31 // pred_check_branch
        %249 = sbr.rel (%p247) target = $region36
      $region35: #{byot_loss.3} parent=31 // pred_region
        %250 = vst [vmem:[#allocation2] sm:$0xff] 0.0
        %251 = vst [vmem:[#allocation2 + $0x8] sm:$0xff] 0.0
        %252 = vst [vmem:[#allocation2 + $0x10] sm:$0xff] 0.0
        %253 = vst [vmem:[#allocation2 + $0x18] sm:$0xff] 0.0
      $region36: #{byot_loss.3} parent=31 // pred_fallthru
        _
      %v254 = vld [vmem:[%s240] sm:$0xff]
      %v255 = vld [vmem:[%s240 + $0x8] sm:$0xff]
      %v256 = vld [vmem:[%s240 + $0x10] sm:$0xff]
      %v257 = vld [vmem:[%s240 + $0x18] sm:$0xff]
      %v258 = vld [vmem:[%s224] sm:$0xff]
      %v259 = vld [vmem:[%s224 + $0x8] sm:$0xff]
      %v260 = vld [vmem:[%s224 + $0x10] sm:$0xff]
      %v261 = vld [vmem:[%s224 + $0x18] sm:$0xff]
      %v262 = vsub.f32 %v258, %v254
      %v263 = vsub.f32 %v259, %v255
      %v264 = vsub.f32 %v260, %v256
      %v265 = vsub.f32 %v261, %v257
      %v266 = vld [vmem:[#allocation2] sm:$0xff]
      %v267 = vld [vmem:[#allocation2 + $0x8] sm:$0xff]
      %v268 = vld [vmem:[#allocation2 + $0x10] sm:$0xff]
      %v269 = vld [vmem:[#allocation2 + $0x18] sm:$0xff]
      %vm270 = vcmp.gt.f32.partialorder %v258, 0.0
      %vm271 = vcmp.gt.f32.partialorder %v259, 0.0
      %vm272 = vcmp.gt.f32.partialorder %v260, 0.0
      %vm273 = vcmp.gt.f32.partialorder %v261, 0.0
      %vm274 = vcmp.gt.f32.partialorder %v254, 0.0
      %vm275 = vcmp.gt.f32.partialorder %v255, 0.0
      %vm276 = vcmp.gt.f32.partialorder %v256, 0.0
      %vm277 = vcmp.gt.f32.partialorder %v257, 0.0
      %vm278 = vmor %vm270, %vm274
      %vm279 = vmor %vm271, %vm275
      %vm280 = vmor %vm272, %vm276
      %vm281 = vmor %vm273, %vm277
      %v282 = vmul.f32 %v262, %v262
      %v283 = vmul.f32 %v263, %v263
      %v284 = vmul.f32 %v264, %v264
      %v285 = vmul.f32 %v265, %v265
      %v286 = vsel %vm278, %v282, 0.0
      %v287 = vsel %vm279, %v283, 0.0
      %v288 = vsel %vm280, %v284, 0.0
      %v289 = vsel %vm281, %v285, 0.0
      %v290 = vadd.f32 %v266, %v286
      %v291 = vadd.f32 %v267, %v287
      %v292 = vadd.f32 %v268, %v288
      %v293 = vadd.f32 %v269, %v289
      %294 = vst [vmem:[#allocation2] sm:$0xff] %v290
      %295 = vst [vmem:[#allocation2 + $0x8] sm:$0xff] %v291
      %296 = vst [vmem:[#allocation2 + $0x10] sm:$0xff] %v292
      %297 = vst [vmem:[#allocation2 + $0x18] sm:$0xff] %v293
      %v298 = vld [vmem:[%s232] sm:$0xff]
      %v299 = vld [vmem:[%s232 + $0x8] sm:$0xff]
      %v300 = vld [vmem:[%s232 + $0x10] sm:$0xff]
      %v301 = vld [vmem:[%s232 + $0x18] sm:$0xff]
      %v302 = vsub.f32 %v298, %v254
      %v303 = vsub.f32 %v299, %v255
      %v304 = vsub.f32 %v300, %v256
      %v305 = vsub.f32 %v301, %v257
      %v306 = vld [vmem:[#allocation2] sm:$0xff]
      %v307 = vld [vmem:[#allocation2 + $0x8] sm:$0xff]
      %v308 = vld [vmem:[#allocation2 + $0x10] sm:$0xff]
      %v309 = vld [vmem:[#allocation2 + $0x18] sm:$0xff]
      %vm310 = vcmp.gt.f32.partialorder %v298, 0.0
      %vm311 = vcmp.gt.f32.partialorder %v299, 0.0
      %vm312 = vcmp.gt.f32.partialorder %v300, 0.0
      %vm313 = vcmp.gt.f32.partialorder %v301, 0.0
      %vm314 = vmor %vm310, %vm274
      %vm315 = vmor %vm311, %vm275
      %vm316 = vmor %vm312, %vm276
      %vm317 = vmor %vm313, %vm277
      %v318 = vmul.f32 %v302, %v302
      %v319 = vmul.f32 %v303, %v303
      %v320 = vmul.f32 %v304, %v304
      %v321 = vmul.f32 %v305, %v305
      %v322 = vsel %vm314, %v318, 0.0
      %v323 = vsel %vm315, %v319, 0.0
      %v324 = vsel %vm316, %v320, 0.0
      %v325 = vsel %vm317, %v321, 0.0
      %v326 = vadd.f32 %v306, %v322
      %v327 = vadd.f32 %v307, %v323
      %v328 = vadd.f32 %v308, %v324
      %v329 = vadd.f32 %v309, %v325
      %330 = vst [vmem:[#allocation2] sm:$0xff] %v326
      %331 = vst [vmem:[#allocation2 + $0x8] sm:$0xff] %v327
      %332 = vst [vmem:[#allocation2 + $0x10] sm:$0xff] %v328
      %333 = vst [vmem:[#allocation2 + $0x18] sm:$0xff] %v329
      // Predicated region
      $region37: #{byot_loss.3} parent=31 // pred_check
        %p334 = pneg %p246
      $region38: #{byot_loss.3} parent=31 // pred_check_branch
        %336 = sbr.rel (%p334) target = $region40
      $region39: #{byot_loss.3} parent=31 // pred_region
        %v337 = vld [vmem:[#allocation2] sm:$0xff]
        %v338 = vld [vmem:[#allocation2 + $0x8] sm:$0xff]
        %v339 = vld [vmem:[#allocation2 + $0x10] sm:$0xff]
        %v340 = vld [vmem:[#allocation2 + $0x18] sm:$0xff]
        %v341 = vadd.f32 %v337, %v338
        %v342 = vadd.f32 %v341, %v339
        %v343 = vadd.f32 %v342, %v340
        %v344 = vrot.slane %v343, 4
        %v345 = vadd.f32 %v343, %v344
        %v346 = vrot.slane %v345, 2
        %v347 = vadd.f32 %v345, %v346
        %v348 = vrot.slane %v347, 1
        %v349 = vadd.f32 %v347, %v348
        %350 = vst [vmem:[%s245] sm:$0x1] %v349
      $region40: #{byot_loss.3} parent=31 // pred_fallthru
        _
      %p351 = scmp.lt.s32.totalorder %s18, 1
      %s352 = scalar_select %p351, %s18, 1
      %s353 = scalar_lea.vmem %s3, %s352
      // Predicated region
      $region41: #{byot_loss.3} parent=31 // pred_check
        %p354 = pneg %p128
      $region42: #{byot_loss.3} parent=31 // pred_check_branch
        %356 = sbr.rel (%p354) target = $region44
      $region43: #{byot_loss.3} parent=31 // pred_region
        _
      $region44: #{byot_loss.3} parent=31 // pred_fallthru
        _
    $region32: #{byot_loss.3} parent=5 // pred_fallthru
      _
    %p357 = scmp.le.s32.totalorder 2, %s9
    // Predicated region
    $region45: #{byot_loss.3} parent=5 // pred_check
      %p358 = pneg %p357
    $region46: #{byot_loss.3} parent=5 // pred_check_branch
      %360 = sbr.rel (%p358) target = $region48
    $region47: #{byot_loss.3} parent=5 // pred_region
      %s361 = ssub.s32 %s9, 2
      // Predicated region
      $region49: #{byot_loss.3} parent=47 // pred_check
        %p362 = pneg %p134
      $region50: #{byot_loss.3} parent=47 // pred_check_branch
        %364 = sbr.rel (%p362) target = $region52
      $region51: #{byot_loss.3} parent=47 // pred_region
        %p365 = scmp.lt.s32.totalorder %s20, 1
        %s366 = scalar_select %p365, %s20, 1
        %s367 = scalar_lea.vmem %s3, %s366
      $region52: #{byot_loss.3} parent=47 // pred_fallthru
        _
    $region48: #{byot_loss.3} parent=5 // pred_fallthru
      _
  $region6: #{byot_loss.3} parent=0 // loop_footer
    %s13 = sadd.s32 1, %s9
  $region7: #{byot_loss.3} parent=0 // loop_footer_branch
    %8 = sbr.rel target = $region3
  $region8: #{byot_loss.3} parent=0 // loop_exit
    _

</llo_original>
